<compile_context>
chip_gen: v7x
topology: tpu7x:2x2x1
jax: 0.10.0
libtpu: 0.0.40
codegen_flags: <defaults>
</compile_context>

<pallas_src>
import jax
import jax.numpy as jnp
from jax import lax
from jax.experimental import pallas as pl
from jax.experimental.pallas import tpu as pltpu


def planar_flow_kernel(scal_ref, z_ref, w_col_ref, params_ref, f_ref, ld_ref):
    # scal_ref:   SMEM (2,)      = [b, w.u]
    # z_ref/f_ref:(TILE_N, D)
    # w_col_ref:  (D, 1)  resident
    # params_ref: (2, D)  resident = [w ; u]
    # ld_ref:     (1, TILE_N)  lane-dense log-det row
    b = scal_ref[0]
    w_dot_u = scal_ref[1]

    z = z_ref[...].astype(jnp.float32)                          # (TILE_N, D)
    w_col = w_col_ref[...]                                      # (D, 1)
    w_row = params_ref[0:1, :]                                  # (1, D)
    u_row = params_ref[1:2, :]                                  # (1, D)

    # ---- f path (rows on sublanes) --------------------------------------
    # lin_col = z @ w + b on the MXU: no (TILE_N, D) z*w temporary and no
    # cross-lane reduce.
    lin_col = jnp.dot(z, w_col, preferred_element_type=jnp.float32) + b
    act_col = jnp.tanh(lin_col)                                 # (TILE_N, 1)
    f_ref[...] = (z + act_col * u_row).astype(f_ref.dtype)

    # ---- log-det path (rows on lanes -> lane-dense store) ---------------
    # Same reduction, transposed orientation: w @ z^T (rhs contracted on its
    # minor dim, the standard q@k^T form) gives lin as a (1, TILE_N) row, so
    # the log-det store is dense instead of TILE_N/8 masked partial stores.
    lin_row = lax.dot_general(w_row, z, (((1,), (1,)), ((), ())),
                              preferred_element_type=jnp.float32) + b
    act_row = jnp.tanh(lin_row)                                 # (1, TILE_N)
    dact_row = 1.0 - act_row * act_row
    ld_ref[...] = jnp.log(jnp.abs(1.0 + dact_row * w_dot_u)).astype(ld_ref.dtype)


def _round_up(x, m):
    return ((x + m - 1) // m) * m


def planar_flow(z, w, u, b, *, vmem_budget_bytes=24 << 20, min_grid_steps=8):
    """z: (N, D); w, u: (D,); b: scalar. Returns (f: (N, D), log_det: (N,))."""
    N, D = z.shape
    itemsize = jnp.dtype(z.dtype).itemsize
    # Sublane granularity: 8 rows for 4-byte dtypes, 16 for bf16, 32 for int8.
    sub = max(8, 32 // itemsize)

    w32 = jnp.asarray(w, jnp.float32)
    u32 = jnp.asarray(u, jnp.float32)
    w_col = w32.reshape(D, 1)                                   # MXU operand
    params = jnp.stack([w32, u32], axis=0)                      # (2, D) [w; u]
    w_dot_u = jnp.dot(w32, u32, precision=lax.Precision.HIGHEST)
    scalars = jnp.stack([jnp.asarray(b, jnp.float32).reshape(()), w_dot_u])

    # --- tile size from the TRUE double-buffered VMEM footprint ----------
    # Per batch row: 2 buffers x (z row + f row) + 2 buffers x log-det row
    # (the (1, TILE_N) f32 block pads to 8 sublanes -> 32 B per row).
    bytes_per_row = 2 * (2 * D * itemsize) + 2 * 8 * 4
    n_cap = _round_up(N, sub)
    rows_cap = max(sub, (vmem_budget_bytes // bytes_per_row) // sub * sub)
    tile_n = min(n_cap, rows_cap)
    grid_n = pl.cdiv(N, tile_n)
    # Megacore balance (v7x has 2 TCs): prefer >= min_grid_steps grid steps as
    # long as tiles stay large enough (>= 2 MiB of z) to amortize the ~0.35 us
    # per-step pipeline overhead.
    if grid_n < min_grid_steps:
        balanced = _round_up(max(pl.cdiv(N, min_grid_steps), sub), sub)
        if balanced < tile_n and balanced * D * itemsize >= (2 << 20):
            tile_n = balanced
            grid_n = pl.cdiv(N, tile_n)

    resident_bytes = 2 * 4 * (8 * _round_up(D, 128) + _round_up(D, 8) * 128)
    footprint = 2 * (2 * tile_n * D * itemsize + 8 * tile_n * 4) + resident_bytes
    # Explicit scoped-VMEM limit above the real footprint; capped so it is
    # valid on every generation (v7x physical VMEM is 64 MiB).
    vmem_limit = int(min(max(footprint + (8 << 20), 32 << 20), 64 << 20))

    f, ld2d = pl.pallas_call(
        planar_flow_kernel,
        out_shape=(
            jax.ShapeDtypeStruct((N, D), z.dtype),
            jax.ShapeDtypeStruct((grid_n, tile_n), jnp.float32),
        ),
        grid=(grid_n,),
        in_specs=[
            pl.BlockSpec(memory_space=pltpu.MemorySpace.SMEM),   # [b, w.u]
            pl.BlockSpec((tile_n, D), lambda i: (i, 0)),         # z tile
            pl.BlockSpec((D, 1), lambda i: (0, 0)),              # w column
            pl.BlockSpec((2, D), lambda i: (0, 0)),              # [w; u] rows
        ],
        out_specs=(
            pl.BlockSpec((tile_n, D), lambda i: (i, 0)),         # f tile
            pl.BlockSpec((1, tile_n), lambda i: (i, 0)),         # log_det row
        ),
        compiler_params=pltpu.CompilerParams(
            dimension_semantics=("parallel",),
            vmem_limit_bytes=vmem_limit,
        ),
    )(scalars, z, w_col, params)

    return f, ld2d.reshape(-1)[:N]


def planar_flow_ref(z, w, u, b):
    lin = (z @ w + b)[:, None]
    f = z + u * jnp.tanh(lin)
    phi = (1.0 - jnp.tanh(lin) ** 2) * w
    log_det = jnp.log(jnp.abs(1.0 + phi @ u))
    return f, log_det


if __name__ == "__main__":
    # Full-precision matmuls everywhere (reference and kernel) so the f32
    # comparison is meaningful on real MXUs as well.
    jax.config.update("jax_default_matmul_precision", "highest")

    key = jax.random.PRNGKey(0)
    k_z, k_w, k_u, k_b = jax.random.split(key, 4)

    N, D = 8, 32
    z = jax.random.normal(k_z, (N, D), dtype=jnp.float32)
    w = jax.random.normal(k_w, (D,), dtype=jnp.float32)   # nn.init.normal_
    u = jax.random.normal(k_u, (D,), dtype=jnp.float32)
    b = jax.random.normal(k_b, (1,), dtype=jnp.float32)[0]
    # Keep w.u >= 0 so 1 + (1 - tanh^2)(w.u) stays well away from 0 and the
    # log|det| check is well-conditioned (the module itself does not enforce
    # invertibility; this only conditions the *test* parameters, not the math).
    u = jnp.where(jnp.dot(w, u) < 0.0, -u, u)

    f, log_det = planar_flow(z, w, u, b)
    f = jax.block_until_ready(f)
    log_det = jax.block_until_ready(log_det)

    f_expected, ld_expected = planar_flow_ref(z, w, u, b)
    assert jnp.allclose(f, f_expected, atol=1e-5, rtol=1e-5)
    assert jnp.allclose(log_det, ld_expected, atol=1e-4, rtol=1e-4)

    # Multi-step grid with a partial last block (1000 % tile != 0): exercises
    # the cdiv grid / masked-boundary path with forced-small tiles.
    N2 = 1000
    z2 = jax.random.normal(k_z, (N2, D), dtype=jnp.float32)
    f2, ld2 = planar_flow(z2, w, u, b, vmem_budget_bytes=96 * 1024)
    f2 = jax.block_until_ready(f2)
    ld2 = jax.block_until_ready(ld2)
    f2_expected, ld2_expected = planar_flow_ref(z2, w, u, b)
    assert jnp.allclose(f2, f2_expected, atol=1e-5, rtol=1e-5)
    assert jnp.allclose(ld2, ld2_expected, atol=1e-4, rtol=1e-4)

    print("KERNEL_OK")
</pallas_src>

<mosaic_0001>
module attributes {stable_mosaic.version = 11 : i64} {
  func.func @planar_flow_kernel(%arg0: i32, %arg1: memref<2xf32, #tpu.memory_space<smem>>, %arg2: memref<8x32xf32, #tpu.memory_space<vmem>>, %arg3: memref<32x1xf32, #tpu.memory_space<vmem>>, %arg4: memref<2x32xf32, #tpu.memory_space<vmem>>, %arg5: memref<8x32xf32, #tpu.memory_space<vmem>>, %arg6: memref<1x8xf32, #tpu.memory_space<vmem>>) attributes {dimension_semantics = [#tpu.dimension_semantics<parallel>], iteration_bounds = array<i64: 1>, scalar_prefetch = 0 : i64, scratch_operands = 0 : i64, tpu.core_type = #tpu.core_type<tc>, window_params = [{transform_indices = @transform_0, window_bounds = array<i64: 2>}, {transform_indices = @transform_1, window_bounds = array<i64: 8, 32>}, {pipeline_mode = #tpu.pipeline_mode<synchronous>, transform_indices = @transform_2, window_bounds = array<i64: 32, 1>}, {pipeline_mode = #tpu.pipeline_mode<synchronous>, transform_indices = @transform_3, window_bounds = array<i64: 2, 32>}, {transform_indices = @transform_4, window_bounds = array<i64: 8, 32>}, {transform_indices = @transform_5, window_bounds = array<i64: 1, 8>}]} {
    %c0 = arith.constant 0 : index
    %0 = memref.load %arg1[%c0] : memref<2xf32, #tpu.memory_space<smem>>
    %c1 = arith.constant 1 : index
    %1 = memref.load %arg1[%c1] : memref<2xf32, #tpu.memory_space<smem>>
    %c0_0 = arith.constant 0 : index
    %c0_1 = arith.constant 0 : index
    %2 = vector.load %arg2[%c0_0, %c0_1] : memref<8x32xf32, #tpu.memory_space<vmem>>, vector<8x32xf32>
    %c0_2 = arith.constant 0 : index
    %c0_3 = arith.constant 0 : index
    %3 = vector.load %arg3[%c0_2, %c0_3] : memref<32x1xf32, #tpu.memory_space<vmem>>, vector<32x1xf32>
    %c0_4 = arith.constant 0 : index
    %c0_5 = arith.constant 0 : index
    %4 = vector.load %arg4[%c0_4, %c0_5] : memref<2x32xf32, #tpu.memory_space<vmem>>, vector<1x32xf32>
    %c1_6 = arith.constant 1 : index
    %c0_7 = arith.constant 0 : index
    %5 = vector.load %arg4[%c1_6, %c0_7] : memref<2x32xf32, #tpu.memory_space<vmem>>, vector<1x32xf32>
    %cst = arith.constant dense<0.000000e+00> : vector<8x1xf32>
    %6 = tpu.matmul %2, %3, %cst {dimension_numbers = #tpu.dot_dimension_numbers<[1], [0], [0], [1], [0, 0, 1, 1], [], []>, precision = #tpu.contract_precision<fp32>} : vector<8x32xf32>, vector<32x1xf32>, vector<8x1xf32> -> vector<8x1xf32>
    %7 = vector.broadcast %0 : f32 to vector<8x1xf32>
    %8 = arith.addf %6, %7 : vector<8x1xf32>
    %9 = math.tanh %8 : vector<8x1xf32>
    %10 = vector.broadcast %9 : vector<8x1xf32> to vector<8x32xf32>
    %11 = vector.broadcast %5 : vector<1x32xf32> to vector<8x32xf32>
    %12 = arith.mulf %10, %11 : vector<8x32xf32>
    %13 = arith.addf %2, %12 : vector<8x32xf32>
    %c0_8 = arith.constant 0 : index
    %c0_9 = arith.constant 0 : index
    %14 = vector.load %arg5[%c0_8, %c0_9] : memref<8x32xf32, #tpu.memory_space<vmem>>, vector<8x32xf32>
    tpu.vector_store %arg5[%c0_8, %c0_9], %13 {strides = array<i32>} : memref<8x32xf32, #tpu.memory_space<vmem>>, vector<8x32xf32>,
    %cst_10 = arith.constant dense<0.000000e+00> : vector<1x8xf32>
    %15 = tpu.matmul %4, %2, %cst_10 {dimension_numbers = #tpu.dot_dimension_numbers<[1], [1], [0], [0], [0, 0, 1, 0], [], []>, precision = #tpu.contract_precision<fp32>} : vector<1x32xf32>, vector<8x32xf32>, vector<1x8xf32> -> vector<1x8xf32>
    %16 = vector.broadcast %0 : f32 to vector<1x8xf32>
    %17 = arith.addf %15, %16 : vector<1x8xf32>
    %18 = math.tanh %17 : vector<1x8xf32>
    %19 = arith.mulf %18, %18 : vector<1x8xf32>
    %cst_11 = arith.constant 1.000000e+00 : f32
    %20 = vector.broadcast %cst_11 : f32 to vector<1x8xf32>
    %21 = arith.subf %20, %19 : vector<1x8xf32>
    %22 = vector.broadcast %1 : f32 to vector<1x8xf32>
    %23 = arith.mulf %21, %22 : vector<1x8xf32>
    %cst_12 = arith.constant 1.000000e+00 : f32
    %24 = vector.broadcast %cst_12 : f32 to vector<1x8xf32>
    %25 = arith.addf %24, %23 : vector<1x8xf32>
    %26 = math.absf %25 : vector<1x8xf32>
    %27 = math.log %26 : vector<1x8xf32>
    %c0_13 = arith.constant 0 : index
    %c0_14 = arith.constant 0 : index
    %28 = vector.load %arg6[%c0_13, %c0_14] : memref<1x8xf32, #tpu.memory_space<vmem>>, vector<1x8xf32>
    tpu.vector_store %arg6[%c0_13, %c0_14], %27 {strides = array<i32>} : memref<1x8xf32, #tpu.memory_space<vmem>>, vector<1x8xf32>,
    return
  }
  func.func @transform_0(%arg0: i32) -> i32 {
    %c0_i32 = arith.constant 0 : i32
    %c0_i32_0 = arith.constant 0 : i32
    return %c0_i32 : i32
  }
  func.func @transform_1(%arg0: i32) -> (i32, i32) {
    %c0_i32 = arith.constant 0 : i32
    %c0_i32_0 = arith.constant 0 : i32
    return %arg0, %c0_i32 : i32, i32
  }
  func.func @transform_2(%arg0: i32) -> (i32, i32) {
    %c0_i32 = arith.constant 0 : i32
    %c0_i32_0 = arith.constant 0 : i32
    %c0_i32_1 = arith.constant 0 : i32
    return %c0_i32, %c0_i32_0 : i32, i32
  }
  func.func @transform_3(%arg0: i32) -> (i32, i32) {
    %c0_i32 = arith.constant 0 : i32
    %c0_i32_0 = arith.constant 0 : i32
    %c0_i32_1 = arith.constant 0 : i32
    return %c0_i32, %c0_i32_0 : i32, i32
  }
  func.func @transform_4(%arg0: i32) -> (i32, i32) {
    %c0_i32 = arith.constant 0 : i32
    %c0_i32_0 = arith.constant 0 : i32
    return %arg0, %c0_i32 : i32, i32
  }
  func.func @transform_5(%arg0: i32) -> (i32, i32) {
    %c0_i32 = arith.constant 0 : i32
    %c0_i32_0 = arith.constant 0 : i32
    return %arg0, %c0_i32 : i32, i32
  }
}

</mosaic_0001>

<llo_original>
// kernel: tpu_custom_call.1
$region0: #{tpu_custom_call.1}
  #allocation0 [shape = 'u32[]', space=smem, size = 0x4, offset = 0x4, fixed_abs, tag = 'smem constant byte address 0x4 - core index']
  #allocation1 [shape = 'u32[144,128]{1,0:T(1,128)}', space=vmem, size = 0x12000, scoped, tag = 'internal scratch']
  %s0 = inlined_call_operand.vmem [shape: f32[2], index: 0, kind: input, shape index: {}]
  %s1 = inlined_call_operand.vmem [shape: f32[8,32], index: 1, kind: input, shape index: {}]
  %s2 = inlined_call_operand.vmem [shape: f32[32,1], index: 2, kind: input, shape index: {}]
  %s3 = inlined_call_operand.vmem [shape: f32[2,32], index: 3, kind: input, shape index: {}]
  %s4 = inlined_call_operand.hbm [shape: f32[8,32], index: 4, kind: output, shape index: {0}]
  %s5 = inlined_call_operand.hbm [shape: f32[1,8], index: 5, kind: output, shape index: {1}]
  %6 = xla_tuple %s4, %s5
  %s7 = sld [smem:[#allocation0]]
  $region38: #{tpu_custom_call.1} parent=0
    _
  %s9 = ssub.s32 1, %s7
  %s10 = scalar_select 0, %s9, %s7
  $region1: #{tpu_custom_call.1} parent=0
    #allocation2 [shape = 'u8[512]{0}', space=smem, size = 0x200, scoped, tag = 'input window, operand 0, single buffered']
    #allocation3 [shape = 's32[1]{0}', space=sflag, size = 0x4, scoped, tag = 'scoped memory for tpu_custom_call.1']
    #allocation4 [shape = 's32[1]{0}', space=sflag, size = 0x4, scoped, tag = 'scoped memory for tpu_custom_call.1']
    #allocation5 [shape = 'u8[4096]{0}', space=vmem, size = 0x1000, scoped, tag = 'output window, operand 0, single buffered']
    #allocation6 [shape = 'u8[512]{0}', space=vmem, size = 0x400, scoped, tag = 'output window, operand 1, single buffered']
    #allocation7 [shape = 's32[1]{0}', space=sflag, size = 0x4, scoped, tag = 'scoped memory for tpu_custom_call.1']
    %11 = vsyncpa [#allocation4], 0
    %12 = vsyncpa [#allocation3], 0
    %13 = vsyncpa [#allocation7], 0
    // Predicated region
    $region2: #{tpu_custom_call.1} parent=1 // pred_check
      _
    $region3: #{tpu_custom_call.1} parent=1 // pred_check_branch
      %15 = sbr.rel (0) target = $region5
    $region4: #{tpu_custom_call.1} parent=1 // pred_region
      %s17 = ssub.s32 16, 16
      %18 = vsyncadd [#allocation4], %s17
      %s20 = sshll.u32 %s0, 4
      %s21 = int_to_ptr.vmem [resolvable:$true] %s20
      %23 = dma.vmem_to_smem %s21, 16, [#allocation2], [#allocation4]
    $region5: #{tpu_custom_call.1} parent=1 // pred_fallthru
      _
    // Predicated region
    $region6: #{tpu_custom_call.1} parent=1 // pred_check
      _
    $region7: #{tpu_custom_call.1} parent=1 // pred_check_branch
      %25 = sbr.rel (0) target = $region9
    $region8: #{tpu_custom_call.1} parent=1 // pred_region
      _
    $region9: #{tpu_custom_call.1} parent=1 // pred_fallthru
      _
    // Predicated region
    $region10: #{tpu_custom_call.1} parent=1 // pred_check
      _
    $region11: #{tpu_custom_call.1} parent=1 // pred_check_branch
      %27 = sbr.rel (0) target = $region13
    $region12: #{tpu_custom_call.1} parent=1 // pred_region
      _
    $region13: #{tpu_custom_call.1} parent=1 // pred_fallthru
      _
    // Predicated region
    $region14: #{tpu_custom_call.1} parent=1 // pred_check
      _
    $region15: #{tpu_custom_call.1} parent=1 // pred_check_branch
      %29 = sbr.rel (0) target = $region17
    $region16: #{tpu_custom_call.1} parent=1 // pred_region
      _
    $region17: #{tpu_custom_call.1} parent=1 // pred_fallthru
      _
    // Predicated region
    $region18: #{tpu_custom_call.1} parent=1 // pred_check
      _
    $region19: #{tpu_custom_call.1} parent=1 // pred_check_branch
      %31 = sbr.rel (0) target = $region21
    $region20: #{tpu_custom_call.1} parent=1 // pred_region
      %32 = dma.done [#allocation4], 16
    $region21: #{tpu_custom_call.1} parent=1 // pred_fallthru
      _
    %33 = sfence
    %s34 = sld [smem:[#allocation2]]
    %s35 = sld [smem:[#allocation2 + $0x1]]
    %v36 = vld [vmem:[%s1] sm:$0xff]
    %v37 = vld [vmem:[%s2] sm:$0xff]
    %v38 = vld [vmem:[%s2 + $0x8] sm:$0xff]
    %v39 = vld [vmem:[%s2 + $0x10] sm:$0xff]
    %v40 = vld [vmem:[%s2 + $0x18] sm:$0xff]
    %v41 = vld [vmem:[%s3] sm:$0x1]
    %v42 = vld [vmem:[%s3 + $0x1] sm:$0x1]
    %v43 = vstv %s34
    %vm44 = vcmask 261120
    %v46 = vsel %vm44, %v36, 0
    %48 = vmatprep.subr.mxu0 0.0
    %v49 = vand.u32 %v37, 4294901760
    %50 = vmatpush1.msra.mxu0 %v49
    %51 = vmatprep.subr.mxu0 0.0
    %v52 = vand.u32 %v38, 4294901760
    %53 = vmatpush1.msra.mxu0 %v52
    %54 = vmatprep.subr.mxu0 0.0
    %v55 = vand.u32 %v39, 4294901760
    %56 = vmatpush1.msra.mxu0 %v55
    %57 = vmatprep.subr.mxu0 0.0
    %v58 = vand.u32 %v40, 4294901760
    %59 = vmatpush1.msra.mxu0 %v58
    %60 = vmatprep.subr.mxu0 0.0
    %61 = vmatpush1.msra.mxu0 0.0
    %62 = vmatprep.subr.mxu0 0.0
    %63 = vmatpush1.msra.mxu0 0.0
    %64 = vmatprep.subr.mxu0 0.0
    %65 = vmatpush1.msra.mxu0 0.0
    %66 = vmatprep.subr.mxu0 0.0
    %67 = vmatpush1.msra.mxu0 0.0
    %68 = vmatprep.subr.mxu0 0.0
    %69 = vmatpush1.msra.mxu0 0.0
    %70 = vmatprep.subr.mxu0 0.0
    %71 = vmatpush1.msra.mxu0 0.0
    %72 = vmatprep.subr.mxu0 0.0
    %73 = vmatpush1.msra.mxu0 0.0
    %74 = vmatprep.subr.mxu0 0.0
    %75 = vmatpush1.msra.mxu0 0.0
    %76 = vmatprep.subr.mxu0 0.0
    %77 = vmatpush1.msra.mxu0 0.0
    %78 = vmatprep.subr.mxu0 0.0
    %79 = vmatpush1.msra.mxu0 0.0
    %80 = vmatprep.subr.mxu0 0.0
    %81 = vmatpush1.msra.mxu0 0.0
    %82 = vmatprep.subr.mxu0 0.0
    %83 = vmatpush1.msra.mxu0 0.0
    %84 = vmatprep.subr.mxu0 0.0
    %85 = vmatpush1.msra.mxu0 0.0
    %86 = vmatprep.subr.mxu0 0.0
    %87 = vmatpush1.msra.mxu0 0.0
    %88 = vmatprep.subr.mxu0 0.0
    %89 = vmatpush1.msra.mxu0 0.0
    %90 = vmatprep.subr.mxu0 0.0
    %91 = vmatpush1.msra.mxu0 0.0
    %92 = vmatprep.subr.mxu0 0.0
    %93 = vmatpush1.msra.mxu0 0.0
    %94 = vmatprep.subr.mxu0 0.0
    %95 = vmatpush1.msra.mxu0 0.0
    %96 = vmatprep.subr.mxu0 0.0
    %97 = vmatpush1.msra.mxu0 0.0
    %98 = vmatprep.subr.mxu0 0.0
    %99 = vmatpush1.msra.mxu0 0.0
    %100 = vmatprep.subr.mxu0 0.0
    %101 = vmatpush1.msra.mxu0 0.0
    %102 = vmatprep.subr.mxu0 0.0
    %103 = vmatpush1.msra.mxu0 0.0
    %104 = vmatprep.subr.mxu0 0.0
    %105 = vmatpush1.msra.mxu0 0.0
    %106 = vmatprep.subr.mxu0 0.0
    %107 = vmatpush1.msra.mxu0 0.0
    %108 = vmatprep.subr.mxu0 0.0
    %109 = vmatpush1.msra.mxu0 0.0
    %110 = vmatprep.subr.mxu0 0.0
    %111 = vmatpush1.msra.mxu0 0.0
    %112 = vmatprep.subr.mxu0 0.0
    %113 = vmatpush1.msra.mxu0 0.0
    %114 = vmatprep.subr.mxu0 0.0
    %115 = vmatpush1.msra.mxu0 0.0
    %116 = vmatprep.mubr.f32.mxu0 0.0
    %v117 = vand.u32 %v46, 4294901760
    %v118 = vsub.f32 %v46, %v117
    %v119 = vand.u32 %v118, 4294901760
    %v120 = vsub.f32 %v118, %v119
    %v121 = vand.u32 %v120, 4294901760
    %122 = vmatmul.mubr.f32.gmra.mrb[0].mxu0 %v121
    %v123 = vpop.f32.mrb[0].mxu0
    %v124 = vadd.f32 %v43, %v123
    %v125 = vpop.f32.mrb[0].mxu0
    %126 = vdwg.mxu0
    %127 = vmatprep.subr.mxu0 0.0
    %v128 = vand.u32 %v37, 4294901760
    %v129 = vsub.f32 %v37, %v128
    %v130 = vand.u32 %v129, 4294901760
    %v131 = vsub.f32 %v129, %v130
    %v132 = vand.u32 %v131, 4294901760
    %133 = vmatpush1.msra.mxu0 %v132
    %134 = vmatprep.subr.mxu0 0.0
    %v135 = vand.u32 %v38, 4294901760
    %v136 = vsub.f32 %v38, %v135
    %v137 = vand.u32 %v136, 4294901760
    %v138 = vsub.f32 %v136, %v137
    %v139 = vand.u32 %v138, 4294901760
    %140 = vmatpush1.msra.mxu0 %v139
    %141 = vmatprep.subr.mxu0 0.0
    %v142 = vand.u32 %v39, 4294901760
    %v143 = vsub.f32 %v39, %v142
    %v144 = vand.u32 %v143, 4294901760
    %v145 = vsub.f32 %v143, %v144
    %v146 = vand.u32 %v145, 4294901760
    %147 = vmatpush1.msra.mxu0 %v146
    %148 = vmatprep.subr.mxu0 0.0
    %v149 = vand.u32 %v40, 4294901760
    %v150 = vsub.f32 %v40, %v149
    %v151 = vand.u32 %v150, 4294901760
    %v152 = vsub.f32 %v150, %v151
    %v153 = vand.u32 %v152, 4294901760
    %154 = vmatpush1.msra.mxu0 %v153
    %155 = vmatprep.subr.mxu0 0.0
    %156 = vmatpush1.msra.mxu0 0.0
    %157 = vmatprep.subr.mxu0 0.0
    %158 = vmatpush1.msra.mxu0 0.0
    %159 = vmatprep.subr.mxu0 0.0
    %160 = vmatpush1.msra.mxu0 0.0
    %161 = vmatprep.subr.mxu0 0.0
    %162 = vmatpush1.msra.mxu0 0.0
    %163 = vmatprep.subr.mxu0 0.0
    %164 = vmatpush1.msra.mxu0 0.0
    %165 = vmatprep.subr.mxu0 0.0
    %166 = vmatpush1.msra.mxu0 0.0
    %167 = vmatprep.subr.mxu0 0.0
    %168 = vmatpush1.msra.mxu0 0.0
    %169 = vmatprep.subr.mxu0 0.0
    %170 = vmatpush1.msra.mxu0 0.0
    %171 = vmatprep.subr.mxu0 0.0
    %172 = vmatpush1.msra.mxu0 0.0
    %173 = vmatprep.subr.mxu0 0.0
    %174 = vmatpush1.msra.mxu0 0.0
    %175 = vmatprep.subr.mxu0 0.0
    %176 = vmatpush1.msra.mxu0 0.0
    %177 = vmatprep.subr.mxu0 0.0
    %178 = vmatpush1.msra.mxu0 0.0
    %179 = vmatprep.subr.mxu0 0.0
    %180 = vmatpush1.msra.mxu0 0.0
    %181 = vmatprep.subr.mxu0 0.0
    %182 = vmatpush1.msra.mxu0 0.0
    %183 = vmatprep.subr.mxu0 0.0
    %184 = vmatpush1.msra.mxu0 0.0
    %185 = vmatprep.subr.mxu0 0.0
    %186 = vmatpush1.msra.mxu0 0.0
    %187 = vmatprep.subr.mxu0 0.0
    %188 = vmatpush1.msra.mxu0 0.0
    %189 = vmatprep.subr.mxu0 0.0
    %190 = vmatpush1.msra.mxu0 0.0
    %191 = vmatprep.subr.mxu0 0.0
    %192 = vmatpush1.msra.mxu0 0.0
    %193 = vmatprep.subr.mxu0 0.0
    %194 = vmatpush1.msra.mxu0 0.0
    %195 = vmatprep.subr.mxu0 0.0
    %196 = vmatpush1.msra.mxu0 0.0
    %197 = vmatprep.subr.mxu0 0.0
    %198 = vmatpush1.msra.mxu0 0.0
    %199 = vmatprep.subr.mxu0 0.0
    %200 = vmatpush1.msra.mxu0 0.0
    %201 = vmatprep.subr.mxu0 0.0
    %202 = vmatpush1.msra.mxu0 0.0
    %203 = vmatprep.subr.mxu0 0.0
    %204 = vmatpush1.msra.mxu0 0.0
    %205 = vmatprep.subr.mxu0 0.0
    %206 = vmatpush1.msra.mxu0 0.0
    %207 = vmatprep.subr.mxu0 0.0
    %208 = vmatpush1.msra.mxu0 0.0
    %209 = vmatprep.subr.mxu0 0.0
    %210 = vmatpush1.msra.mxu0 0.0
    %211 = vmatprep.mubr.f32.mxu0 0.0
    %v212 = vand.u32 %v46, 4294901760
    %213 = vmatmul.mubr.f32.gmra.mrb[0].mxu0 %v212
    %v214 = vpop.f32.mrb[0].mxu0
    %v215 = vadd.f32 %v124, %v214
    %v216 = vpop.f32.mrb[0].mxu0
    %217 = vdwg.mxu0
    %218 = vmatprep.subr.mxu0 0.0
    %v219 = vand.u32 %v37, 4294901760
    %v220 = vsub.f32 %v37, %v219
    %221 = vmatpush1.msra.mxu0 %v220
    %222 = vmatprep.subr.mxu0 0.0
    %v223 = vand.u32 %v38, 4294901760
    %v224 = vsub.f32 %v38, %v223
    %225 = vmatpush1.msra.mxu0 %v224
    %226 = vmatprep.subr.mxu0 0.0
    %v227 = vand.u32 %v39, 4294901760
    %v228 = vsub.f32 %v39, %v227
    %229 = vmatpush1.msra.mxu0 %v228
    %230 = vmatprep.subr.mxu0 0.0
    %v231 = vand.u32 %v40, 4294901760
    %v232 = vsub.f32 %v40, %v231
    %233 = vmatpush1.msra.mxu0 %v232
    %234 = vmatprep.subr.mxu0 0.0
    %235 = vmatpush1.msra.mxu0 0.0
    %236 = vmatprep.subr.mxu0 0.0
    %237 = vmatpush1.msra.mxu0 0.0
    %238 = vmatprep.subr.mxu0 0.0
    %239 = vmatpush1.msra.mxu0 0.0
    %240 = vmatprep.subr.mxu0 0.0
    %241 = vmatpush1.msra.mxu0 0.0
    %242 = vmatprep.subr.mxu0 0.0
    %243 = vmatpush1.msra.mxu0 0.0
    %244 = vmatprep.subr.mxu0 0.0
    %245 = vmatpush1.msra.mxu0 0.0
    %246 = vmatprep.subr.mxu0 0.0
    %247 = vmatpush1.msra.mxu0 0.0
    %248 = vmatprep.subr.mxu0 0.0
    %249 = vmatpush1.msra.mxu0 0.0
    %250 = vmatprep.subr.mxu0 0.0
    %251 = vmatpush1.msra.mxu0 0.0
    %252 = vmatprep.subr.mxu0 0.0
    %253 = vmatpush1.msra.mxu0 0.0
    %254 = vmatprep.subr.mxu0 0.0
    %255 = vmatpush1.msra.mxu0 0.0
    %256 = vmatprep.subr.mxu0 0.0
    %257 = vmatpush1.msra.mxu0 0.0
    %258 = vmatprep.subr.mxu0 0.0
    %259 = vmatpush1.msra.mxu0 0.0
    %260 = vmatprep.subr.mxu0 0.0
    %261 = vmatpush1.msra.mxu0 0.0
    %262 = vmatprep.subr.mxu0 0.0
    %263 = vmatpush1.msra.mxu0 0.0
    %264 = vmatprep.subr.mxu0 0.0
    %265 = vmatpush1.msra.mxu0 0.0
    %266 = vmatprep.subr.mxu0 0.0
    %267 = vmatpush1.msra.mxu0 0.0
    %268 = vmatprep.subr.mxu0 0.0
    %269 = vmatpush1.msra.mxu0 0.0
    %270 = vmatprep.subr.mxu0 0.0
    %271 = vmatpush1.msra.mxu0 0.0
    %272 = vmatprep.subr.mxu0 0.0
    %273 = vmatpush1.msra.mxu0 0.0
    %274 = vmatprep.subr.mxu0 0.0
    %275 = vmatpush1.msra.mxu0 0.0
    %276 = vmatprep.subr.mxu0 0.0
    %277 = vmatpush1.msra.mxu0 0.0
    %278 = vmatprep.subr.mxu0 0.0
    %279 = vmatpush1.msra.mxu0 0.0
    %280 = vmatprep.subr.mxu0 0.0
    %281 = vmatpush1.msra.mxu0 0.0
    %282 = vmatprep.subr.mxu0 0.0
    %283 = vmatpush1.msra.mxu0 0.0
    %284 = vmatprep.subr.mxu0 0.0
    %285 = vmatpush1.msra.mxu0 0.0
    %286 = vmatprep.subr.mxu0 0.0
    %287 = vmatpush1.msra.mxu0 0.0
    %288 = vmatprep.subr.mxu0 0.0
    %289 = vmatpush1.msra.mxu0 0.0
    %290 = vmatprep.mubr.f32.mxu0 0.0
    %v291 = vand.u32 %v46, 4294901760
    %v292 = vsub.f32 %v46, %v291
    %293 = vmatmul.mubr.f32.gmra.mrb[0].mxu0 %v292
    %v294 = vpop.f32.mrb[0].mxu0
    %v295 = vadd.f32 %v215, %v294
    %v296 = vpop.f32.mrb[0].mxu0
    %297 = vdwg.mxu0
    %298 = vmatprep.subr.mxu0 0.0
    %v299 = vand.u32 %v37, 4294901760
    %300 = vmatpush1.msra.mxu0 %v299
    %301 = vmatprep.subr.mxu0 0.0
    %v302 = vand.u32 %v38, 4294901760
    %303 = vmatpush1.msra.mxu0 %v302
    %304 = vmatprep.subr.mxu0 0.0
    %v305 = vand.u32 %v39, 4294901760
    %306 = vmatpush1.msra.mxu0 %v305
    %307 = vmatprep.subr.mxu0 0.0
    %v308 = vand.u32 %v40, 4294901760
    %309 = vmatpush1.msra.mxu0 %v308
    %310 = vmatprep.subr.mxu0 0.0
    %311 = vmatpush1.msra.mxu0 0.0
    %312 = vmatprep.subr.mxu0 0.0
    %313 = vmatpush1.msra.mxu0 0.0
    %314 = vmatprep.subr.mxu0 0.0
    %315 = vmatpush1.msra.mxu0 0.0
    %316 = vmatprep.subr.mxu0 0.0
    %317 = vmatpush1.msra.mxu0 0.0
    %318 = vmatprep.subr.mxu0 0.0
    %319 = vmatpush1.msra.mxu0 0.0
    %320 = vmatprep.subr.mxu0 0.0
    %321 = vmatpush1.msra.mxu0 0.0
    %322 = vmatprep.subr.mxu0 0.0
    %323 = vmatpush1.msra.mxu0 0.0
    %324 = vmatprep.subr.mxu0 0.0
    %325 = vmatpush1.msra.mxu0 0.0
    %326 = vmatprep.subr.mxu0 0.0
    %327 = vmatpush1.msra.mxu0 0.0
    %328 = vmatprep.subr.mxu0 0.0
    %329 = vmatpush1.msra.mxu0 0.0
    %330 = vmatprep.subr.mxu0 0.0
    %331 = vmatpush1.msra.mxu0 0.0
    %332 = vmatprep.subr.mxu0 0.0
    %333 = vmatpush1.msra.mxu0 0.0
    %334 = vmatprep.subr.mxu0 0.0
    %335 = vmatpush1.msra.mxu0 0.0
    %336 = vmatprep.subr.mxu0 0.0
    %337 = vmatpush1.msra.mxu0 0.0
    %338 = vmatprep.subr.mxu0 0.0
    %339 = vmatpush1.msra.mxu0 0.0
    %340 = vmatprep.subr.mxu0 0.0
    %341 = vmatpush1.msra.mxu0 0.0
    %342 = vmatprep.subr.mxu0 0.0
    %343 = vmatpush1.msra.mxu0 0.0
    %344 = vmatprep.subr.mxu0 0.0
    %345 = vmatpush1.msra.mxu0 0.0
    %346 = vmatprep.subr.mxu0 0.0
    %347 = vmatpush1.msra.mxu0 0.0
    %348 = vmatprep.subr.mxu0 0.0
    %349 = vmatpush1.msra.mxu0 0.0
    %350 = vmatprep.subr.mxu0 0.0
    %351 = vmatpush1.msra.mxu0 0.0
    %352 = vmatprep.subr.mxu0 0.0
    %353 = vmatpush1.msra.mxu0 0.0
    %354 = vmatprep.subr.mxu0 0.0
    %355 = vmatpush1.msra.mxu0 0.0
    %356 = vmatprep.subr.mxu0 0.0
    %357 = vmatpush1.msra.mxu0 0.0
    %358 = vmatprep.subr.mxu0 0.0
    %359 = vmatpush1.msra.mxu0 0.0
    %360 = vmatprep.subr.mxu0 0.0
    %361 = vmatpush1.msra.mxu0 0.0
    %362 = vmatprep.subr.mxu0 0.0
    %363 = vmatpush1.msra.mxu0 0.0
    %364 = vmatprep.subr.mxu0 0.0
    %365 = vmatpush1.msra.mxu0 0.0
    %366 = vmatprep.mubr.f32.mxu0 0.0
    %v367 = vand.u32 %v46, 4294901760
    %v368 = vsub.f32 %v46, %v367
    %v369 = vand.u32 %v368, 4294901760
    %370 = vmatmul.mubr.f32.gmra.mrb[0].mxu0 %v369
    %v371 = vpop.f32.mrb[0].mxu0
    %v372 = vadd.f32 %v295, %v371
    %v373 = vpop.f32.mrb[0].mxu0
    %374 = vdwg.mxu0
    %375 = vmatprep.subr.mxu0 0.0
    %v376 = vand.u32 %v37, 4294901760
    %v377 = vsub.f32 %v37, %v376
    %v378 = vand.u32 %v377, 4294901760
    %379 = vmatpush1.msra.mxu0 %v378
    %380 = vmatprep.subr.mxu0 0.0
    %v381 = vand.u32 %v38, 4294901760
    %v382 = vsub.f32 %v38, %v381
    %v383 = vand.u32 %v382, 4294901760
    %384 = vmatpush1.msra.mxu0 %v383
    %385 = vmatprep.subr.mxu0 0.0
    %v386 = vand.u32 %v39, 4294901760
    %v387 = vsub.f32 %v39, %v386
    %v388 = vand.u32 %v387, 4294901760
    %389 = vmatpush1.msra.mxu0 %v388
    %390 = vmatprep.subr.mxu0 0.0
    %v391 = vand.u32 %v40, 4294901760
    %v392 = vsub.f32 %v40, %v391
    %v393 = vand.u32 %v392, 4294901760
    %394 = vmatpush1.msra.mxu0 %v393
    %395 = vmatprep.subr.mxu0 0.0
    %396 = vmatpush1.msra.mxu0 0.0
    %397 = vmatprep.subr.mxu0 0.0
    %398 = vmatpush1.msra.mxu0 0.0
    %399 = vmatprep.subr.mxu0 0.0
    %400 = vmatpush1.msra.mxu0 0.0
    %401 = vmatprep.subr.mxu0 0.0
    %402 = vmatpush1.msra.mxu0 0.0
    %403 = vmatprep.subr.mxu0 0.0
    %404 = vmatpush1.msra.mxu0 0.0
    %405 = vmatprep.subr.mxu0 0.0
    %406 = vmatpush1.msra.mxu0 0.0
    %407 = vmatprep.subr.mxu0 0.0
    %408 = vmatpush1.msra.mxu0 0.0
    %409 = vmatprep.subr.mxu0 0.0
    %410 = vmatpush1.msra.mxu0 0.0
    %411 = vmatprep.subr.mxu0 0.0
    %412 = vmatpush1.msra.mxu0 0.0
    %413 = vmatprep.subr.mxu0 0.0
    %414 = vmatpush1.msra.mxu0 0.0
    %415 = vmatprep.subr.mxu0 0.0
    %416 = vmatpush1.msra.mxu0 0.0
    %417 = vmatprep.subr.mxu0 0.0
    %418 = vmatpush1.msra.mxu0 0.0
    %419 = vmatprep.subr.mxu0 0.0
    %420 = vmatpush1.msra.mxu0 0.0
    %421 = vmatprep.subr.mxu0 0.0
    %422 = vmatpush1.msra.mxu0 0.0
    %423 = vmatprep.subr.mxu0 0.0
    %424 = vmatpush1.msra.mxu0 0.0
    %425 = vmatprep.subr.mxu0 0.0
    %426 = vmatpush1.msra.mxu0 0.0
    %427 = vmatprep.subr.mxu0 0.0
    %428 = vmatpush1.msra.mxu0 0.0
    %429 = vmatprep.subr.mxu0 0.0
    %430 = vmatpush1.msra.mxu0 0.0
    %431 = vmatprep.subr.mxu0 0.0
    %432 = vmatpush1.msra.mxu0 0.0
    %433 = vmatprep.subr.mxu0 0.0
    %434 = vmatpush1.msra.mxu0 0.0
    %435 = vmatprep.subr.mxu0 0.0
    %436 = vmatpush1.msra.mxu0 0.0
    %437 = vmatprep.subr.mxu0 0.0
    %438 = vmatpush1.msra.mxu0 0.0
    %439 = vmatprep.subr.mxu0 0.0
    %440 = vmatpush1.msra.mxu0 0.0
    %441 = vmatprep.subr.mxu0 0.0
    %442 = vmatpush1.msra.mxu0 0.0
    %443 = vmatprep.subr.mxu0 0.0
    %444 = vmatpush1.msra.mxu0 0.0
    %445 = vmatprep.subr.mxu0 0.0
    %446 = vmatpush1.msra.mxu0 0.0
    %447 = vmatprep.subr.mxu0 0.0
    %448 = vmatpush1.msra.mxu0 0.0
    %449 = vmatprep.subr.mxu0 0.0
    %450 = vmatpush1.msra.mxu0 0.0
    %451 = vmatprep.mubr.f32.mxu0 0.0
    %v452 = vand.u32 %v46, 4294901760
    %453 = vmatmul.mubr.f32.gmra.mrb[0].mxu0 %v452
    %v454 = vpop.f32.mrb[0].mxu0
    %v455 = vadd.f32 %v372, %v454
    %v456 = vpop.f32.mrb[0].mxu0
    %457 = vdwg.mxu0
    %458 = vmatprep.subr.mxu0 0.0
    %v459 = vand.u32 %v37, 4294901760
    %460 = vmatpush1.msra.mxu0 %v459
    %461 = vmatprep.subr.mxu0 0.0
    %v462 = vand.u32 %v38, 4294901760
    %463 = vmatpush1.msra.mxu0 %v462
    %464 = vmatprep.subr.mxu0 0.0
    %v465 = vand.u32 %v39, 4294901760
    %466 = vmatpush1.msra.mxu0 %v465
    %467 = vmatprep.subr.mxu0 0.0
    %v468 = vand.u32 %v40, 4294901760
    %469 = vmatpush1.msra.mxu0 %v468
    %470 = vmatprep.subr.mxu0 0.0
    %471 = vmatpush1.msra.mxu0 0.0
    %472 = vmatprep.subr.mxu0 0.0
    %473 = vmatpush1.msra.mxu0 0.0
    %474 = vmatprep.subr.mxu0 0.0
    %475 = vmatpush1.msra.mxu0 0.0
    %476 = vmatprep.subr.mxu0 0.0
    %477 = vmatpush1.msra.mxu0 0.0
    %478 = vmatprep.subr.mxu0 0.0
    %479 = vmatpush1.msra.mxu0 0.0
    %480 = vmatprep.subr.mxu0 0.0
    %481 = vmatpush1.msra.mxu0 0.0
    %482 = vmatprep.subr.mxu0 0.0
    %483 = vmatpush1.msra.mxu0 0.0
    %484 = vmatprep.subr.mxu0 0.0
    %485 = vmatpush1.msra.mxu0 0.0
    %486 = vmatprep.subr.mxu0 0.0
    %487 = vmatpush1.msra.mxu0 0.0
    %488 = vmatprep.subr.mxu0 0.0
    %489 = vmatpush1.msra.mxu0 0.0
    %490 = vmatprep.subr.mxu0 0.0
    %491 = vmatpush1.msra.mxu0 0.0
    %492 = vmatprep.subr.mxu0 0.0
    %493 = vmatpush1.msra.mxu0 0.0
    %494 = vmatprep.subr.mxu0 0.0
    %495 = vmatpush1.msra.mxu0 0.0
    %496 = vmatprep.subr.mxu0 0.0
    %497 = vmatpush1.msra.mxu0 0.0
    %498 = vmatprep.subr.mxu0 0.0
    %499 = vmatpush1.msra.mxu0 0.0
    %500 = vmatprep.subr.mxu0 0.0
    %501 = vmatpush1.msra.mxu0 0.0
    %502 = vmatprep.subr.mxu0 0.0
    %503 = vmatpush1.msra.mxu0 0.0
    %504 = vmatprep.subr.mxu0 0.0
    %505 = vmatpush1.msra.mxu0 0.0
    %506 = vmatprep.subr.mxu0 0.0
    %507 = vmatpush1.msra.mxu0 0.0
    %508 = vmatprep.subr.mxu0 0.0
    %509 = vmatpush1.msra.mxu0 0.0
    %510 = vmatprep.subr.mxu0 0.0
    %511 = vmatpush1.msra.mxu0 0.0
    %512 = vmatprep.subr.mxu0 0.0
    %513 = vmatpush1.msra.mxu0 0.0
    %514 = vmatprep.subr.mxu0 0.0
    %515 = vmatpush1.msra.mxu0 0.0
    %516 = vmatprep.subr.mxu0 0.0
    %517 = vmatpush1.msra.mxu0 0.0
    %518 = vmatprep.subr.mxu0 0.0
    %519 = vmatpush1.msra.mxu0 0.0
    %520 = vmatprep.subr.mxu0 0.0
    %521 = vmatpush1.msra.mxu0 0.0
    %522 = vmatprep.subr.mxu0 0.0
    %523 = vmatpush1.msra.mxu0 0.0
    %524 = vmatprep.subr.mxu0 0.0
    %525 = vmatpush1.msra.mxu0 0.0
    %526 = vmatprep.mubr.f32.mxu0 0.0
    %v527 = vand.u32 %v46, 4294901760
    %528 = vmatmul.mubr.f32.gmra.mrb[0].mxu0 %v527
    %v529 = vpop.f32.mrb[0].mxu0
    %v530 = vadd.f32 %v455, %v529
    %v531 = vpop.f32.mrb[0].mxu0
    %532 = vdwg.mxu0
    %v533 = vtanh.pop %v530
    %535 = vset.pattern.permute.xlu0 0
    %536 = vperm.xlu0 %535, %v533
    %v537 = vpop.permute.xlu0 %536
    %v539 = vlaneseq
    %v540 = vshrl.u32 %v539, 7
    %v541 = vsub.s32 0, %v540
    %v542 = vrot.slane %v42, %v541
    %v543 = vmul.f32 %v537, %v542
    %v544 = vadd.f32 %v36, %v543
    %545 = vst.msk [vmem:[#allocation5] sm:$0xff] %vm44, %v544
    %v547 = vsel %vm44, %v41, 0
    %549 = vmatprep.subr.mxu0 0.0
    %v550 = vand.u32 %v46, 4294901760
    %551 = vmatpush1.xpose.msra.mxu0 %v550
    %552 = vmatprep.subr.mxu0 0.0
    %553 = vmatpush1.xpose.msra.mxu0 0.0
    %554 = vmatprep.subr.mxu0 0.0
    %555 = vmatpush1.xpose.msra.mxu0 0.0
    %556 = vmatprep.subr.mxu0 0.0
    %557 = vmatpush1.xpose.msra.mxu0 0.0
    %558 = vmatprep.subr.mxu0 0.0
    %559 = vmatpush1.xpose.msra.mxu0 0.0
    %560 = vmatprep.subr.mxu0 0.0
    %561 = vmatpush1.xpose.msra.mxu0 0.0
    %562 = vmatprep.subr.mxu0 0.0
    %563 = vmatpush1.xpose.msra.mxu0 0.0
    %564 = vmatprep.subr.mxu0 0.0
    %565 = vmatpush1.xpose.msra.mxu0 0.0
    %566 = vmatprep.subr.mxu0 0.0
    %567 = vmatpush1.xpose.msra.mxu0 0.0
    %568 = vmatprep.subr.mxu0 0.0
    %569 = vmatpush1.xpose.msra.mxu0 0.0
    %570 = vmatprep.subr.mxu0 0.0
    %571 = vmatpush1.xpose.msra.mxu0 0.0
    %572 = vmatprep.subr.mxu0 0.0
    %573 = vmatpush1.xpose.msra.mxu0 0.0
    %574 = vmatprep.subr.mxu0 0.0
    %575 = vmatpush1.xpose.msra.mxu0 0.0
    %576 = vmatprep.subr.mxu0 0.0
    %577 = vmatpush1.xpose.msra.mxu0 0.0
    %578 = vmatprep.subr.mxu0 0.0
    %579 = vmatpush1.xpose.msra.mxu0 0.0
    %580 = vmatprep.subr.mxu0 0.0
    %581 = vmatpush1.xpose.msra.mxu0 0.0
    %582 = vmatprep.subr.mxu0 0.0
    %583 = vmatpush1.xpose.msra.mxu0 0.0
    %584 = vmatprep.subr.mxu0 0.0
    %585 = vmatpush1.xpose.msra.mxu0 0.0
    %586 = vmatprep.subr.mxu0 0.0
    %587 = vmatpush1.xpose.msra.mxu0 0.0
    %588 = vmatprep.subr.mxu0 0.0
    %589 = vmatpush1.xpose.msra.mxu0 0.0
    %590 = vmatprep.subr.mxu0 0.0
    %591 = vmatpush1.xpose.msra.mxu0 0.0
    %592 = vmatprep.subr.mxu0 0.0
    %593 = vmatpush1.xpose.msra.mxu0 0.0
    %594 = vmatprep.subr.mxu0 0.0
    %595 = vmatpush1.xpose.msra.mxu0 0.0
    %596 = vmatprep.subr.mxu0 0.0
    %597 = vmatpush1.xpose.msra.mxu0 0.0
    %598 = vmatprep.subr.mxu0 0.0
    %599 = vmatpush1.xpose.msra.mxu0 0.0
    %600 = vmatprep.subr.mxu0 0.0
    %601 = vmatpush1.xpose.msra.mxu0 0.0
    %602 = vmatprep.subr.mxu0 0.0
    %603 = vmatpush1.xpose.msra.mxu0 0.0
    %604 = vmatprep.subr.mxu0 0.0
    %605 = vmatpush1.xpose.msra.mxu0 0.0
    %606 = vmatprep.subr.mxu0 0.0
    %607 = vmatpush1.xpose.msra.mxu0 0.0
    %608 = vmatprep.subr.mxu0 0.0
    %609 = vmatpush1.xpose.msra.mxu0 0.0
    %610 = vmatprep.subr.mxu0 0.0
    %611 = vmatpush1.xpose.msra.mxu0 0.0
    %612 = vmatprep.subr.mxu0 0.0
    %613 = vmatpush1.xpose.msra.mxu0 0.0
    %614 = vmatprep.mubr.f32.mxu0 0.0
    %v615 = vand.u32 %v547, 4294901760
    %v616 = vsub.f32 %v547, %v615
    %v617 = vand.u32 %v616, 4294901760
    %v618 = vsub.f32 %v616, %v617
    %v619 = vand.u32 %v618, 4294901760
    %620 = vmatmul.mubr.f32.gmra.mrb[0].mxu0 %v619
    %v621 = vpop.f32.mrb[0].mxu0
    %v622 = vadd.f32 %v43, %v621
    %v623 = vpop.f32.mrb[0].mxu0
    %624 = vdwg.mxu0
    %625 = vmatprep.subr.mxu0 0.0
    %v626 = vand.u32 %v46, 4294901760
    %v627 = vsub.f32 %v46, %v626
    %v628 = vand.u32 %v627, 4294901760
    %v629 = vsub.f32 %v627, %v628
    %v630 = vand.u32 %v629, 4294901760
    %631 = vmatpush1.xpose.msra.mxu0 %v630
    %632 = vmatprep.subr.mxu0 0.0
    %633 = vmatpush1.xpose.msra.mxu0 0.0
    %634 = vmatprep.subr.mxu0 0.0
    %635 = vmatpush1.xpose.msra.mxu0 0.0
    %636 = vmatprep.subr.mxu0 0.0
    %637 = vmatpush1.xpose.msra.mxu0 0.0
    %638 = vmatprep.subr.mxu0 0.0
    %639 = vmatpush1.xpose.msra.mxu0 0.0
    %640 = vmatprep.subr.mxu0 0.0
    %641 = vmatpush1.xpose.msra.mxu0 0.0
    %642 = vmatprep.subr.mxu0 0.0
    %643 = vmatpush1.xpose.msra.mxu0 0.0
    %644 = vmatprep.subr.mxu0 0.0
    %645 = vmatpush1.xpose.msra.mxu0 0.0
    %646 = vmatprep.subr.mxu0 0.0
    %647 = vmatpush1.xpose.msra.mxu0 0.0
    %648 = vmatprep.subr.mxu0 0.0
    %649 = vmatpush1.xpose.msra.mxu0 0.0
    %650 = vmatprep.subr.mxu0 0.0
    %651 = vmatpush1.xpose.msra.mxu0 0.0
    %652 = vmatprep.subr.mxu0 0.0
    %653 = vmatpush1.xpose.msra.mxu0 0.0
    %654 = vmatprep.subr.mxu0 0.0
    %655 = vmatpush1.xpose.msra.mxu0 0.0
    %656 = vmatprep.subr.mxu0 0.0
    %657 = vmatpush1.xpose.msra.mxu0 0.0
    %658 = vmatprep.subr.mxu0 0.0
    %659 = vmatpush1.xpose.msra.mxu0 0.0
    %660 = vmatprep.subr.mxu0 0.0
    %661 = vmatpush1.xpose.msra.mxu0 0.0
    %662 = vmatprep.subr.mxu0 0.0
    %663 = vmatpush1.xpose.msra.mxu0 0.0
    %664 = vmatprep.subr.mxu0 0.0
    %665 = vmatpush1.xpose.msra.mxu0 0.0
    %666 = vmatprep.subr.mxu0 0.0
    %667 = vmatpush1.xpose.msra.mxu0 0.0
    %668 = vmatprep.subr.mxu0 0.0
    %669 = vmatpush1.xpose.msra.mxu0 0.0
    %670 = vmatprep.subr.mxu0 0.0
    %671 = vmatpush1.xpose.msra.mxu0 0.0
    %672 = vmatprep.subr.mxu0 0.0
    %673 = vmatpush1.xpose.msra.mxu0 0.0
    %674 = vmatprep.subr.mxu0 0.0
    %675 = vmatpush1.xpose.msra.mxu0 0.0
    %676 = vmatprep.subr.mxu0 0.0
    %677 = vmatpush1.xpose.msra.mxu0 0.0
    %678 = vmatprep.subr.mxu0 0.0
    %679 = vmatpush1.xpose.msra.mxu0 0.0
    %680 = vmatprep.subr.mxu0 0.0
    %681 = vmatpush1.xpose.msra.mxu0 0.0
    %682 = vmatprep.subr.mxu0 0.0
    %683 = vmatpush1.xpose.msra.mxu0 0.0
    %684 = vmatprep.subr.mxu0 0.0
    %685 = vmatpush1.xpose.msra.mxu0 0.0
    %686 = vmatprep.subr.mxu0 0.0
    %687 = vmatpush1.xpose.msra.mxu0 0.0
    %688 = vmatprep.subr.mxu0 0.0
    %689 = vmatpush1.xpose.msra.mxu0 0.0
    %690 = vmatprep.subr.mxu0 0.0
    %691 = vmatpush1.xpose.msra.mxu0 0.0
    %692 = vmatprep.subr.mxu0 0.0
    %693 = vmatpush1.xpose.msra.mxu0 0.0
    %694 = vmatprep.mubr.f32.mxu0 0.0
    %v695 = vand.u32 %v547, 4294901760
    %696 = vmatmul.mubr.f32.gmra.mrb[0].mxu0 %v695
    %v697 = vpop.f32.mrb[0].mxu0
    %v698 = vadd.f32 %v622, %v697
    %v699 = vpop.f32.mrb[0].mxu0
    %700 = vdwg.mxu0
    %701 = vmatprep.subr.mxu0 0.0
    %v702 = vand.u32 %v46, 4294901760
    %v703 = vsub.f32 %v46, %v702
    %704 = vmatpush1.xpose.msra.mxu0 %v703
    %705 = vmatprep.subr.mxu0 0.0
    %706 = vmatpush1.xpose.msra.mxu0 0.0
    %707 = vmatprep.subr.mxu0 0.0
    %708 = vmatpush1.xpose.msra.mxu0 0.0
    %709 = vmatprep.subr.mxu0 0.0
    %710 = vmatpush1.xpose.msra.mxu0 0.0
    %711 = vmatprep.subr.mxu0 0.0
    %712 = vmatpush1.xpose.msra.mxu0 0.0
    %713 = vmatprep.subr.mxu0 0.0
    %714 = vmatpush1.xpose.msra.mxu0 0.0
    %715 = vmatprep.subr.mxu0 0.0
    %716 = vmatpush1.xpose.msra.mxu0 0.0
    %717 = vmatprep.subr.mxu0 0.0
    %718 = vmatpush1.xpose.msra.mxu0 0.0
    %719 = vmatprep.subr.mxu0 0.0
    %720 = vmatpush1.xpose.msra.mxu0 0.0
    %721 = vmatprep.subr.mxu0 0.0
    %722 = vmatpush1.xpose.msra.mxu0 0.0
    %723 = vmatprep.subr.mxu0 0.0
    %724 = vmatpush1.xpose.msra.mxu0 0.0
    %725 = vmatprep.subr.mxu0 0.0
    %726 = vmatpush1.xpose.msra.mxu0 0.0
    %727 = vmatprep.subr.mxu0 0.0
    %728 = vmatpush1.xpose.msra.mxu0 0.0
    %729 = vmatprep.subr.mxu0 0.0
    %730 = vmatpush1.xpose.msra.mxu0 0.0
    %731 = vmatprep.subr.mxu0 0.0
    %732 = vmatpush1.xpose.msra.mxu0 0.0
    %733 = vmatprep.subr.mxu0 0.0
    %734 = vmatpush1.xpose.msra.mxu0 0.0
    %735 = vmatprep.subr.mxu0 0.0
    %736 = vmatpush1.xpose.msra.mxu0 0.0
    %737 = vmatprep.subr.mxu0 0.0
    %738 = vmatpush1.xpose.msra.mxu0 0.0
    %739 = vmatprep.subr.mxu0 0.0
    %740 = vmatpush1.xpose.msra.mxu0 0.0
    %741 = vmatprep.subr.mxu0 0.0
    %742 = vmatpush1.xpose.msra.mxu0 0.0
    %743 = vmatprep.subr.mxu0 0.0
    %744 = vmatpush1.xpose.msra.mxu0 0.0
    %745 = vmatprep.subr.mxu0 0.0
    %746 = vmatpush1.xpose.msra.mxu0 0.0
    %747 = vmatprep.subr.mxu0 0.0
    %748 = vmatpush1.xpose.msra.mxu0 0.0
    %749 = vmatprep.subr.mxu0 0.0
    %750 = vmatpush1.xpose.msra.mxu0 0.0
    %751 = vmatprep.subr.mxu0 0.0
    %752 = vmatpush1.xpose.msra.mxu0 0.0
    %753 = vmatprep.subr.mxu0 0.0
    %754 = vmatpush1.xpose.msra.mxu0 0.0
    %755 = vmatprep.subr.mxu0 0.0
    %756 = vmatpush1.xpose.msra.mxu0 0.0
    %757 = vmatprep.subr.mxu0 0.0
    %758 = vmatpush1.xpose.msra.mxu0 0.0
    %759 = vmatprep.subr.mxu0 0.0
    %760 = vmatpush1.xpose.msra.mxu0 0.0
    %761 = vmatprep.subr.mxu0 0.0
    %762 = vmatpush1.xpose.msra.mxu0 0.0
    %763 = vmatprep.subr.mxu0 0.0
    %764 = vmatpush1.xpose.msra.mxu0 0.0
    %765 = vmatprep.subr.mxu0 0.0
    %766 = vmatpush1.xpose.msra.mxu0 0.0
    %767 = vmatprep.mubr.f32.mxu0 0.0
    %v768 = vand.u32 %v547, 4294901760
    %v769 = vsub.f32 %v547, %v768
    %770 = vmatmul.mubr.f32.gmra.mrb[0].mxu0 %v769
    %v771 = vpop.f32.mrb[0].mxu0
    %v772 = vadd.f32 %v698, %v771
    %v773 = vpop.f32.mrb[0].mxu0
    %774 = vdwg.mxu0
    %775 = vmatprep.subr.mxu0 0.0
    %v776 = vand.u32 %v46, 4294901760
    %777 = vmatpush1.xpose.msra.mxu0 %v776
    %778 = vmatprep.subr.mxu0 0.0
    %779 = vmatpush1.xpose.msra.mxu0 0.0
    %780 = vmatprep.subr.mxu0 0.0
    %781 = vmatpush1.xpose.msra.mxu0 0.0
    %782 = vmatprep.subr.mxu0 0.0
    %783 = vmatpush1.xpose.msra.mxu0 0.0
    %784 = vmatprep.subr.mxu0 0.0
    %785 = vmatpush1.xpose.msra.mxu0 0.0
    %786 = vmatprep.subr.mxu0 0.0
    %787 = vmatpush1.xpose.msra.mxu0 0.0
    %788 = vmatprep.subr.mxu0 0.0
    %789 = vmatpush1.xpose.msra.mxu0 0.0
    %790 = vmatprep.subr.mxu0 0.0
    %791 = vmatpush1.xpose.msra.mxu0 0.0
    %792 = vmatprep.subr.mxu0 0.0
    %793 = vmatpush1.xpose.msra.mxu0 0.0
    %794 = vmatprep.subr.mxu0 0.0
    %795 = vmatpush1.xpose.msra.mxu0 0.0
    %796 = vmatprep.subr.mxu0 0.0
    %797 = vmatpush1.xpose.msra.mxu0 0.0
    %798 = vmatprep.subr.mxu0 0.0
    %799 = vmatpush1.xpose.msra.mxu0 0.0
    %800 = vmatprep.subr.mxu0 0.0
    %801 = vmatpush1.xpose.msra.mxu0 0.0
    %802 = vmatprep.subr.mxu0 0.0
    %803 = vmatpush1.xpose.msra.mxu0 0.0
    %804 = vmatprep.subr.mxu0 0.0
    %805 = vmatpush1.xpose.msra.mxu0 0.0
    %806 = vmatprep.subr.mxu0 0.0
    %807 = vmatpush1.xpose.msra.mxu0 0.0
    %808 = vmatprep.subr.mxu0 0.0
    %809 = vmatpush1.xpose.msra.mxu0 0.0
    %810 = vmatprep.subr.mxu0 0.0
    %811 = vmatpush1.xpose.msra.mxu0 0.0
    %812 = vmatprep.subr.mxu0 0.0
    %813 = vmatpush1.xpose.msra.mxu0 0.0
    %814 = vmatprep.subr.mxu0 0.0
    %815 = vmatpush1.xpose.msra.mxu0 0.0
    %816 = vmatprep.subr.mxu0 0.0
    %817 = vmatpush1.xpose.msra.mxu0 0.0
    %818 = vmatprep.subr.mxu0 0.0
    %819 = vmatpush1.xpose.msra.mxu0 0.0
    %820 = vmatprep.subr.mxu0 0.0
    %821 = vmatpush1.xpose.msra.mxu0 0.0
    %822 = vmatprep.subr.mxu0 0.0
    %823 = vmatpush1.xpose.msra.mxu0 0.0
    %824 = vmatprep.subr.mxu0 0.0
    %825 = vmatpush1.xpose.msra.mxu0 0.0
    %826 = vmatprep.subr.mxu0 0.0
    %827 = vmatpush1.xpose.msra.mxu0 0.0
    %828 = vmatprep.subr.mxu0 0.0
    %829 = vmatpush1.xpose.msra.mxu0 0.0
    %830 = vmatprep.subr.mxu0 0.0
    %831 = vmatpush1.xpose.msra.mxu0 0.0
    %832 = vmatprep.subr.mxu0 0.0
    %833 = vmatpush1.xpose.msra.mxu0 0.0
    %834 = vmatprep.subr.mxu0 0.0
    %835 = vmatpush1.xpose.msra.mxu0 0.0
    %836 = vmatprep.subr.mxu0 0.0
    %837 = vmatpush1.xpose.msra.mxu0 0.0
    %838 = vmatprep.subr.mxu0 0.0
    %839 = vmatpush1.xpose.msra.mxu0 0.0
    %840 = vmatprep.mubr.f32.mxu0 0.0
    %v841 = vand.u32 %v547, 4294901760
    %v842 = vsub.f32 %v547, %v841
    %v843 = vand.u32 %v842, 4294901760
    %844 = vmatmul.mubr.f32.gmra.mrb[0].mxu0 %v843
    %v845 = vpop.f32.mrb[0].mxu0
    %v846 = vadd.f32 %v772, %v845
    %v847 = vpop.f32.mrb[0].mxu0
    %848 = vdwg.mxu0
    %849 = vmatprep.subr.mxu0 0.0
    %v850 = vand.u32 %v46, 4294901760
    %v851 = vsub.f32 %v46, %v850
    %v852 = vand.u32 %v851, 4294901760
    %853 = vmatpush1.xpose.msra.mxu0 %v852
    %854 = vmatprep.subr.mxu0 0.0
    %855 = vmatpush1.xpose.msra.mxu0 0.0
    %856 = vmatprep.subr.mxu0 0.0
    %857 = vmatpush1.xpose.msra.mxu0 0.0
    %858 = vmatprep.subr.mxu0 0.0
    %859 = vmatpush1.xpose.msra.mxu0 0.0
    %860 = vmatprep.subr.mxu0 0.0
    %861 = vmatpush1.xpose.msra.mxu0 0.0
    %862 = vmatprep.subr.mxu0 0.0
    %863 = vmatpush1.xpose.msra.mxu0 0.0
    %864 = vmatprep.subr.mxu0 0.0
    %865 = vmatpush1.xpose.msra.mxu0 0.0
    %866 = vmatprep.subr.mxu0 0.0
    %867 = vmatpush1.xpose.msra.mxu0 0.0
    %868 = vmatprep.subr.mxu0 0.0
    %869 = vmatpush1.xpose.msra.mxu0 0.0
    %870 = vmatprep.subr.mxu0 0.0
    %871 = vmatpush1.xpose.msra.mxu0 0.0
    %872 = vmatprep.subr.mxu0 0.0
    %873 = vmatpush1.xpose.msra.mxu0 0.0
    %874 = vmatprep.subr.mxu0 0.0
    %875 = vmatpush1.xpose.msra.mxu0 0.0
    %876 = vmatprep.subr.mxu0 0.0
    %877 = vmatpush1.xpose.msra.mxu0 0.0
    %878 = vmatprep.subr.mxu0 0.0
    %879 = vmatpush1.xpose.msra.mxu0 0.0
    %880 = vmatprep.subr.mxu0 0.0
    %881 = vmatpush1.xpose.msra.mxu0 0.0
    %882 = vmatprep.subr.mxu0 0.0
    %883 = vmatpush1.xpose.msra.mxu0 0.0
    %884 = vmatprep.subr.mxu0 0.0
    %885 = vmatpush1.xpose.msra.mxu0 0.0
    %886 = vmatprep.subr.mxu0 0.0
    %887 = vmatpush1.xpose.msra.mxu0 0.0
    %888 = vmatprep.subr.mxu0 0.0
    %889 = vmatpush1.xpose.msra.mxu0 0.0
    %890 = vmatprep.subr.mxu0 0.0
    %891 = vmatpush1.xpose.msra.mxu0 0.0
    %892 = vmatprep.subr.mxu0 0.0
    %893 = vmatpush1.xpose.msra.mxu0 0.0
    %894 = vmatprep.subr.mxu0 0.0
    %895 = vmatpush1.xpose.msra.mxu0 0.0
    %896 = vmatprep.subr.mxu0 0.0
    %897 = vmatpush1.xpose.msra.mxu0 0.0
    %898 = vmatprep.subr.mxu0 0.0
    %899 = vmatpush1.xpose.msra.mxu0 0.0
    %900 = vmatprep.subr.mxu0 0.0
    %901 = vmatpush1.xpose.msra.mxu0 0.0
    %902 = vmatprep.subr.mxu0 0.0
    %903 = vmatpush1.xpose.msra.mxu0 0.0
    %904 = vmatprep.subr.mxu0 0.0
    %905 = vmatpush1.xpose.msra.mxu0 0.0
    %906 = vmatprep.subr.mxu0 0.0
    %907 = vmatpush1.xpose.msra.mxu0 0.0
    %908 = vmatprep.subr.mxu0 0.0
    %909 = vmatpush1.xpose.msra.mxu0 0.0
    %910 = vmatprep.subr.mxu0 0.0
    %911 = vmatpush1.xpose.msra.mxu0 0.0
    %912 = vmatprep.subr.mxu0 0.0
    %913 = vmatpush1.xpose.msra.mxu0 0.0
    %914 = vmatprep.subr.mxu0 0.0
    %915 = vmatpush1.xpose.msra.mxu0 0.0
    %916 = vmatprep.mubr.f32.mxu0 0.0
    %v917 = vand.u32 %v547, 4294901760
    %918 = vmatmul.mubr.f32.gmra.mrb[0].mxu0 %v917
    %v919 = vpop.f32.mrb[0].mxu0
    %v920 = vadd.f32 %v846, %v919
    %v921 = vpop.f32.mrb[0].mxu0
    %922 = vdwg.mxu0
    %923 = vmatprep.subr.mxu0 0.0
    %v924 = vand.u32 %v46, 4294901760
    %925 = vmatpush1.xpose.msra.mxu0 %v924
    %926 = vmatprep.subr.mxu0 0.0
    %927 = vmatpush1.xpose.msra.mxu0 0.0
    %928 = vmatprep.subr.mxu0 0.0
    %929 = vmatpush1.xpose.msra.mxu0 0.0
    %930 = vmatprep.subr.mxu0 0.0
    %931 = vmatpush1.xpose.msra.mxu0 0.0
    %932 = vmatprep.subr.mxu0 0.0
    %933 = vmatpush1.xpose.msra.mxu0 0.0
    %934 = vmatprep.subr.mxu0 0.0
    %935 = vmatpush1.xpose.msra.mxu0 0.0
    %936 = vmatprep.subr.mxu0 0.0
    %937 = vmatpush1.xpose.msra.mxu0 0.0
    %938 = vmatprep.subr.mxu0 0.0
    %939 = vmatpush1.xpose.msra.mxu0 0.0
    %940 = vmatprep.subr.mxu0 0.0
    %941 = vmatpush1.xpose.msra.mxu0 0.0
    %942 = vmatprep.subr.mxu0 0.0
    %943 = vmatpush1.xpose.msra.mxu0 0.0
    %944 = vmatprep.subr.mxu0 0.0
    %945 = vmatpush1.xpose.msra.mxu0 0.0
    %946 = vmatprep.subr.mxu0 0.0
    %947 = vmatpush1.xpose.msra.mxu0 0.0
    %948 = vmatprep.subr.mxu0 0.0
    %949 = vmatpush1.xpose.msra.mxu0 0.0
    %950 = vmatprep.subr.mxu0 0.0
    %951 = vmatpush1.xpose.msra.mxu0 0.0
    %952 = vmatprep.subr.mxu0 0.0
    %953 = vmatpush1.xpose.msra.mxu0 0.0
    %954 = vmatprep.subr.mxu0 0.0
    %955 = vmatpush1.xpose.msra.mxu0 0.0
    %956 = vmatprep.subr.mxu0 0.0
    %957 = vmatpush1.xpose.msra.mxu0 0.0
    %958 = vmatprep.subr.mxu0 0.0
    %959 = vmatpush1.xpose.msra.mxu0 0.0
    %960 = vmatprep.subr.mxu0 0.0
    %961 = vmatpush1.xpose.msra.mxu0 0.0
    %962 = vmatprep.subr.mxu0 0.0
    %963 = vmatpush1.xpose.msra.mxu0 0.0
    %964 = vmatprep.subr.mxu0 0.0
    %965 = vmatpush1.xpose.msra.mxu0 0.0
    %966 = vmatprep.subr.mxu0 0.0
    %967 = vmatpush1.xpose.msra.mxu0 0.0
    %968 = vmatprep.subr.mxu0 0.0
    %969 = vmatpush1.xpose.msra.mxu0 0.0
    %970 = vmatprep.subr.mxu0 0.0
    %971 = vmatpush1.xpose.msra.mxu0 0.0
    %972 = vmatprep.subr.mxu0 0.0
    %973 = vmatpush1.xpose.msra.mxu0 0.0
    %974 = vmatprep.subr.mxu0 0.0
    %975 = vmatpush1.xpose.msra.mxu0 0.0
    %976 = vmatprep.subr.mxu0 0.0
    %977 = vmatpush1.xpose.msra.mxu0 0.0
    %978 = vmatprep.subr.mxu0 0.0
    %979 = vmatpush1.xpose.msra.mxu0 0.0
    %980 = vmatprep.subr.mxu0 0.0
    %981 = vmatpush1.xpose.msra.mxu0 0.0
    %982 = vmatprep.subr.mxu0 0.0
    %983 = vmatpush1.xpose.msra.mxu0 0.0
    %984 = vmatprep.subr.mxu0 0.0
    %985 = vmatpush1.xpose.msra.mxu0 0.0
    %986 = vmatprep.subr.mxu0 0.0
    %987 = vmatpush1.xpose.msra.mxu0 0.0
    %988 = vmatprep.mubr.f32.mxu0 0.0
    %v989 = vand.u32 %v547, 4294901760
    %990 = vmatmul.mubr.f32.gmra.mrb[0].mxu0 %v989
    %v991 = vpop.f32.mrb[0].mxu0
    %v992 = vadd.f32 %v920, %v991
    %v993 = vpop.f32.mrb[0].mxu0
    %994 = vdwg.mxu0
    %v995 = vtanh.pop %v992
    %v996 = vmul.f32 %v995, %v995
    %v997 = vsub.f32 1.0, %v996
    %v998 = vstv %s35
    %v999 = vmul.f32 %v997, %v998
    %v1000 = vadd.f32 %v999, 1.0
    %v1001 = vand.u32 2147483647, %v1000
    %v1002 = vlog2.pop %v1001
    %v1003 = vmul.f32 %v1002, 0.6931472
    %vm1004 = vcmask 57344
    %1005 = vst.msk [vmem:[#allocation6] sm:$0x1] %vm1004, %v1003
    // Predicated region
    $region22: #{tpu_custom_call.1} parent=1 // pred_check
      _
    $region23: #{tpu_custom_call.1} parent=1 // pred_check_branch
      %1007 = sbr.rel (0) target = $region25
    $region24: #{tpu_custom_call.1} parent=1 // pred_region
      %s1009 = ssub.s32 128, 128
      %1010 = vsyncadd [#allocation3], %s1009
      %s1012 = sshll.u32 [#allocation5], 4
      %s1013 = int_to_ptr.vmem [resolvable:$true] %s1012
      %1015 = dma.vmem_to_hbm [thread:$0]  %s1013, 128, %s4, [#allocation3]
    $region25: #{tpu_custom_call.1} parent=1 // pred_fallthru
      _
    // Predicated region
    $region26: #{tpu_custom_call.1} parent=1 // pred_check
      _
    $region27: #{tpu_custom_call.1} parent=1 // pred_check_branch
      %1017 = sbr.rel (0) target = $region29
    $region28: #{tpu_custom_call.1} parent=1 // pred_region
      %s1019 = ssub.s32 16, 16
      %1020 = vsyncadd [#allocation7], %s1019
      %s1022 = sshll.u32 [#allocation6], 4
      %s1023 = int_to_ptr.vmem [resolvable:$true] %s1022
      %1025 = dma.vmem_to_hbm [thread:$0]  %s1023, 16, %s5, [#allocation7]
    $region29: #{tpu_custom_call.1} parent=1 // pred_fallthru
      _
    // Predicated region
    $region30: #{tpu_custom_call.1} parent=1 // pred_check
      _
    $region31: #{tpu_custom_call.1} parent=1 // pred_check_branch
      %1027 = sbr.rel (0) target = $region33
    $region32: #{tpu_custom_call.1} parent=1 // pred_region
      %1028 = dma.done [#allocation3], 128
    $region33: #{tpu_custom_call.1} parent=1 // pred_fallthru
      _
    // Predicated region
    $region34: #{tpu_custom_call.1} parent=1 // pred_check
      _
    $region35: #{tpu_custom_call.1} parent=1 // pred_check_branch
      %1030 = sbr.rel (0) target = $region37
    $region36: #{tpu_custom_call.1} parent=1 // pred_region
      %1031 = dma.done [#allocation7], 16
    $region37: #{tpu_custom_call.1} parent=1 // pred_fallthru
      _
    %1032 = vsyncpa [#allocation3], 1
    %1033 = vsyncpa [#allocation7], 1
    %1034 = vsyncpa [#allocation4], 1

</llo_original>
